<compile_context>
chip_gen: v5e
topology: v5e:2x2
jax: 0.10.0
libtpu: 0.0.40
codegen_flags: <defaults>
</compile_context>

<pallas_src>
import functools

import jax
import jax.numpy as jnp
import numpy as np
from jax.experimental import pallas as pl
from jax.experimental.pallas import tpu as pltpu

N_JOINT = 23
N_PART = 24


def _make_part2joints():
    # TODO(synk): the real SMPL PART2JOINTS lookup table is not provided in the
    # module source; build a deterministic synthetic (24, 23) binary table.
    tbl = np.zeros((N_PART, N_JOINT), dtype=np.float32)
    for p in range(N_PART):
        for j in range(N_JOINT):
            if abs(j - p) <= 1:
                tbl[p, j] = 1.0
    return jnp.asarray(tbl)


def _resolve_mlp1_mode(mode):
    """True -> per-step mlp1 (v5e), False -> block-diagonal mlp1 (v6e/v7x)."""
    if mode == "per_step":
        return True
    if mode == "blockdiag":
        return False
    # auto: v5e is MXU-bound on this kernel (kron(eye(T),W1) does 8x the real
    # MACs), so use the per-step formulation there; v6e/v7x are HBM-bound and
    # prefer the single block-diagonal matmul.
    try:
        dk = jax.devices()[0].device_kind.lower()
        return ("v5e" in dk) or ("v5 lite" in dk) or ("v5litepod" in dk)
    except Exception:
        return False


def pose_seq_encoder_kernel(x_ref, w_ref, p2j_ref, w1_ref, b1_ref, w2_ref,
                            b2_ref, out_ref, *, fg_threshold, T,
                            per_step_mlp1):
    """One grid step = TN rows.

    Block-diagonal mode (per_step_mlp1=False):
      x_ref:   (TN, T*JD)      compute dtype
      p2j_ref: (24, T*JD)      compute dtype (PART2JOINTS expanded + tiled)
      w1_ref:  (T*JD, T*D1)    block-diagonal mlp1 weight
    Per-step mode (per_step_mlp1=True):
      x_ref:   (TN, T, JD)     compute dtype
      p2j_ref: (24, JD)        compute dtype (PART2JOINTS expanded)
      w1_ref:  (JD, D1)        original mlp1 weight
    Common:
      w_ref:   (TN, 24)  f32   blend weights
      b1_ref:  (1, T*D1) f32
      w2_ref:  (T*D1, D2)
      b2_ref:  (1, D2)   f32
      out_ref: (TN, D2)
    """
    blend = w_ref[...]                                           # (TN, 24) f32
    tn = blend.shape[0]

    # ---- localize_seq_code (enable=True path) ----
    wmax = jnp.max(blend, axis=1, keepdims=True)                 # (TN, 1)
    iota = jax.lax.broadcasted_iota(jnp.int32, (tn, N_PART), 1)
    # first index attaining the max (== torch/jnp argmax for distinct maxima)
    part_idx = jnp.min(jnp.where(blend == wmax, iota, N_PART),
                       axis=1, keepdims=True)                    # (TN, 1)
    p2j = p2j_ref[...]
    onehot = (iota == part_idx).astype(p2j.dtype)                # (TN, 24)
    is_fg = (wmax > fg_threshold).astype(jnp.float32)            # (TN, 1)
    # Mask values are exactly 0/1 -> compute directly in the compute dtype
    # (no cast pass).  No `* is_fg` here: the final output gate zeroes
    # background rows, so gating the mask is redundant work.
    mask = jnp.dot(onehot, p2j, preferred_element_type=p2j.dtype)

    w1 = w1_ref[...]
    if per_step_mlp1:
        # v5e formulation: T small matmuls against the original (JD, D1) W1.
        parts = []
        for t in range(T):
            xm_t = x_ref[:, t, :] * mask                         # (TN, JD)
            parts.append(jnp.dot(xm_t, w1,
                                 preferred_element_type=jnp.float32))
        h1 = jnp.concatenate(parts, axis=1)                      # (TN, T*D1)
    else:
        # v6e/v7x formulation: one block-diagonal matmul, output already in
        # the (T*D1) layout mlp2 consumes.
        xm = x_ref[...] * mask                                   # (TN, T*JD)
        h1 = jnp.dot(xm, w1, preferred_element_type=jnp.float32)

    h1 = jnp.maximum(h1 + b1_ref[...], 0.0)                      # (TN, T*D1) f32

    # ---- mlp2 (+ ReLU) ----
    x2 = jnp.dot(h1, w2_ref[...],
                 preferred_element_type=jnp.float32) + b2_ref[...]
    x2 = jnp.maximum(x2, 0.0)                                    # (TN, D2)

    # bg_condition == 'zero_output' with localize enabled
    out_ref[...] = (x2 * is_fg).astype(out_ref.dtype)


def pose_seq_encoder(x, weights, params, *, fg_threshold=0.2, tile_n=4096,
                     compute_dtype=jnp.bfloat16, param_dtype=None,
                     out_dtype=jnp.float32, mlp1_mode="auto"):
    """x: (N, T, 23, D0), weights: (N, 24) -> (N, D2)."""
    N, T, J, D0 = x.shape
    assert J == N_JOINT  # TODO(synk): posedelta_condition (23+2) split variant not implemented
    JD = J * D0
    if param_dtype is None:
        param_dtype = compute_dtype

    W1 = jnp.asarray(params["W1"], jnp.float32)                  # (JD, D1)
    b1 = jnp.asarray(params["b1"], jnp.float32)                  # (D1,)
    W2 = jnp.asarray(params["W2"], jnp.float32)                  # (T*D1, D2)
    b2 = jnp.asarray(params["b2"], jnp.float32)                  # (D2,)
    p2j = jnp.asarray(params["p2j"], jnp.float32)                # (24, 23)
    D1 = W1.shape[1]
    D2 = W2.shape[1]
    assert W2.shape[0] == T * D1

    per_step = _resolve_mlp1_mode(mlp1_mode)

    # ---- tile selection: multiple of 16 (bf16 packing), VMEM-budgeted ----
    def _rup16(v):
        return ((int(v) + 15) // 16) * 16

    x_bytes = jnp.dtype(compute_dtype).itemsize
    w_bytes = jnp.dtype(param_dtype).itemsize
    o_bytes = jnp.dtype(out_dtype).itemsize
    n_feat = T * JD

    def _vmem_est(t):
        est = 2 * t * n_feat * x_bytes                 # x (double-buffered)
        est += 2 * t * N_PART * 4                      # blend weights
        est += 2 * t * D2 * o_bytes                    # out (double-buffered)
        est += 2 * t * n_feat * x_bytes                # mask + masked-x temps
        est += t * T * D1 * 4                          # h1 accumulator (f32)
        est += N_PART * n_feat * x_bytes               # p2j table
        est += (JD * D1 if per_step else n_feat * T * D1) * w_bytes
        est += T * D1 * D2 * w_bytes + (T * D1 + D2) * 4
        return est

    tn = min(_rup16(tile_n), _rup16(N))
    VMEM_BUDGET = 40 * 1024 * 1024                     # leaves headroom on v7x (64 MiB)
    while tn > 256 and _vmem_est(tn) > VMEM_BUDGET:
        tn = max(256, _rup16(tn // 2))
    vmem_limit = int(min(56 * 1024 * 1024,
                         max(32 * 1024 * 1024, _vmem_est(tn) * 1.4)))

    # ---- glue (tiny, plain JAX, once per call) ----
    b1t = jnp.tile(b1.reshape(1, D1), (1, T))                    # (1, T*D1)
    if per_step:
        x_in = x.reshape(N, T, JD).astype(compute_dtype)
        p2j_arg = jnp.repeat(p2j, D0, axis=1).astype(compute_dtype)     # (24, JD)
        w1_arg = W1.astype(param_dtype)                                  # (JD, D1)
        x_spec = pl.BlockSpec((tn, T, JD), lambda i: (i, 0, 0))
        p2j_spec = pl.BlockSpec((N_PART, JD), lambda i: (0, 0))
        w1_spec = pl.BlockSpec((JD, D1), lambda i: (0, 0))
    else:
        x_in = x.reshape(N, T * JD).astype(compute_dtype)
        # PART2JOINTS expanded to per-feature axis and tiled over T so the
        # mask lands directly in x's flattened (T*JD) layout.
        p2j_arg = jnp.tile(jnp.repeat(p2j, D0, axis=1),
                           (1, T)).astype(compute_dtype)                 # (24, T*JD)
        # Block-diagonal mlp1 weight: all T steps in one matmul.
        w1_arg = jnp.kron(jnp.eye(T, dtype=jnp.float32),
                          W1).astype(param_dtype)                        # (T*JD, T*D1)
        x_spec = pl.BlockSpec((tn, T * JD), lambda i: (i, 0))
        p2j_spec = pl.BlockSpec((N_PART, T * JD), lambda i: (0, 0))
        w1_spec = pl.BlockSpec((T * JD, T * D1), lambda i: (0, 0))

    w_in = weights.astype(jnp.float32)

    # ---- pad N so every block is full; even grid for v7x megacore balance ----
    grid = int(pl.cdiv(N, tn))
    if grid > 1 and grid % 2 == 1:
        grid += 1
    n_pad = grid * tn
    if n_pad != N:
        pad_x = [(0, n_pad - N)] + [(0, 0)] * (x_in.ndim - 1)
        x_in = jnp.pad(x_in, pad_x)
        w_in = jnp.pad(w_in, ((0, n_pad - N), (0, 0)))

    kernel = functools.partial(pose_seq_encoder_kernel,
                               fg_threshold=float(fg_threshold),
                               T=T, per_step_mlp1=per_step)

    out = pl.pallas_call(
        kernel,
        out_shape=jax.ShapeDtypeStruct((n_pad, D2), out_dtype),
        grid_spec=pltpu.PrefetchScalarGridSpec(
            num_scalar_prefetch=0,
            grid=(grid,),
            in_specs=[
                x_spec,                                           # x (tiled over N)
                pl.BlockSpec((tn, N_PART), lambda i: (i, 0)),     # blend weights
                p2j_spec,                                         # p2j table (resident)
                w1_spec,                                          # W1 (resident)
                pl.BlockSpec((1, T * D1), lambda i: (0, 0)),      # b1 tiled
                pl.BlockSpec((T * D1, D2), lambda i: (0, 0)),     # W2 (resident)
                pl.BlockSpec((1, D2), lambda i: (0, 0)),          # b2
            ],
            out_specs=pl.BlockSpec((tn, D2), lambda i: (i, 0)),
        ),
        compiler_params=pltpu.CompilerParams(
            dimension_semantics=("parallel",),        # megacore sharding over N
            vmem_limit_bytes=vmem_limit,
        ),
    )(x_in, w_in, p2j_arg, w1_arg, b1t, W2.astype(param_dtype),
      b2.reshape(1, D2))
    return out[:N]


def _reference(x, weights, params, fg_threshold=0.2):
    """Pure-JAX reference mirroring the PyTorch forward."""
    N, T, J, D0 = x.shape
    p2j = params["p2j"]
    part = jnp.argmax(weights, axis=1)
    joints_mask = p2j[part]                                         # (N, 23)
    is_fg = (jnp.max(weights, axis=1, keepdims=True) > fg_threshold).astype(jnp.float32)
    joints_mask = joints_mask * is_fg
    y = x * joints_mask[:, None, :, None]
    xf = y.reshape(N, T, -1)
    x1 = jax.nn.relu(xf @ params["W1"] + params["b1"])
    x1f = x1.reshape(N, -1)
    x2 = jax.nn.relu(x1f @ params["W2"] + params["b2"])
    return x2 * is_fg


if __name__ == "__main__":
    key = jax.random.PRNGKey(0)
    k1, k2, k3, k4, k5, k6, k7, k8 = jax.random.split(key, 8)

    # module config: length=T=8, representation='axis-angle' (D0=3), D1=D2=32
    N, T, J, D0 = 2, 8, N_JOINT, 3
    D1, D2 = 32, 32
    fg_threshold = 0.2

    x = jax.random.normal(k1, (N, T, J, D0), jnp.float32)
    weights = jax.random.uniform(k2, (N, N_PART), jnp.float32)

    params = dict(
        W1=jax.random.normal(k3, (J * D0, D1), jnp.float32) * 0.1,
        b1=jax.random.normal(k4, (D1,), jnp.float32) * 0.1,
        W2=jax.random.normal(k5, (D1 * T, D2), jnp.float32) * 0.1,
        b2=jax.random.normal(k6, (D2,), jnp.float32) * 0.1,
        p2j=_make_part2joints(),
    )

    ref = _reference(x, weights, params, fg_threshold)

    # exact-precision path, block-diagonal mlp1 (v6e/v7x formulation)
    out_bd = pose_seq_encoder(x, weights, params, fg_threshold=fg_threshold,
                              compute_dtype=jnp.float32,
                              param_dtype=jnp.float32,
                              mlp1_mode="blockdiag")
    out_bd = jax.block_until_ready(out_bd)
    assert out_bd.shape == (N, D2)
    np.testing.assert_allclose(np.asarray(out_bd), np.asarray(ref),
                               rtol=1e-4, atol=1e-4)

    # exact-precision path, per-step mlp1 (v5e formulation)
    out_ps = pose_seq_encoder(x, weights, params, fg_threshold=fg_threshold,
                              compute_dtype=jnp.float32,
                              param_dtype=jnp.float32,
                              mlp1_mode="per_step")
    out_ps = jax.block_until_ready(out_ps)
    np.testing.assert_allclose(np.asarray(out_ps), np.asarray(ref),
                               rtol=1e-4, atol=1e-4)

    # default (auto chip-specific mlp1, bf16 x / weights, f32 accum)
    out_def = pose_seq_encoder(x, weights, params, fg_threshold=fg_threshold)
    out_def = jax.block_until_ready(out_def)
    np.testing.assert_allclose(np.asarray(out_def), np.asarray(ref),
                               rtol=5e-2, atol=5e-2)

    # larger N with a tiny tile to exercise padding + even-grid logic
    N2 = 37
    x2 = jax.random.normal(k7, (N2, T, J, D0), jnp.float32)
    w2 = jax.random.uniform(k8, (N2, N_PART), jnp.float32)
    ref2 = _reference(x2, w2, params, fg_threshold)
    out2 = pose_seq_encoder(x2, w2, params, fg_threshold=fg_threshold,
                            tile_n=16, compute_dtype=jnp.float32,
                            param_dtype=jnp.float32)
    out2 = jax.block_until_ready(out2)
    assert out2.shape == (N2, D2)
    np.testing.assert_allclose(np.asarray(out2), np.asarray(ref2),
                               rtol=1e-4, atol=1e-4)

    print("KERNEL_OK")
</pallas_src>

<mosaic_0001>
module attributes {stable_mosaic.version = 11 : i64} {
  func.func @pose_seq_encoder_kernel(%arg0: i32, %arg1: memref<16x552xf32, #tpu.memory_space<vmem>>, %arg2: memref<16x24xf32, #tpu.memory_space<vmem>>, %arg3: memref<24x552xf32, #tpu.memory_space<vmem>>, %arg4: memref<552x256xf32, #tpu.memory_space<vmem>>, %arg5: memref<1x256xf32, #tpu.memory_space<vmem>>, %arg6: memref<256x32xf32, #tpu.memory_space<vmem>>, %arg7: memref<1x32xf32, #tpu.memory_space<vmem>>, %arg8: memref<16x32xf32, #tpu.memory_space<vmem>>) attributes {dimension_semantics = [#tpu.dimension_semantics<parallel>], iteration_bounds = array<i64: 1>, scalar_prefetch = 0 : i64, scratch_operands = 0 : i64, tpu.core_type = #tpu.core_type<tc>, window_params = [{transform_indices = @transform_0, window_bounds = array<i64: 16, 552>}, {transform_indices = @transform_1, window_bounds = array<i64: 16, 24>}, {pipeline_mode = #tpu.pipeline_mode<synchronous>, transform_indices = @transform_2, window_bounds = array<i64: 24, 552>}, {pipeline_mode = #tpu.pipeline_mode<synchronous>, transform_indices = @transform_3, window_bounds = array<i64: 552, 256>}, {pipeline_mode = #tpu.pipeline_mode<synchronous>, transform_indices = @transform_4, window_bounds = array<i64: 1, 256>}, {pipeline_mode = #tpu.pipeline_mode<synchronous>, transform_indices = @transform_5, window_bounds = array<i64: 256, 32>}, {pipeline_mode = #tpu.pipeline_mode<synchronous>, transform_indices = @transform_6, window_bounds = array<i64: 1, 32>}, {transform_indices = @transform_7, window_bounds = array<i64: 16, 32>}]} {
    %c0 = arith.constant 0 : index
    %c0_0 = arith.constant 0 : index
    %0 = vector.load %arg2[%c0, %c0_0] : memref<16x24xf32, #tpu.memory_space<vmem>>, vector<16x24xf32>
    %cst = arith.constant dense<0xFF800000> : vector<16xf32>
    %1 = vector.multi_reduction <maximumf>, %0, %cst [1] : vector<16x24xf32> to vector<16xf32>
    %2 = vector.shape_cast %1 : vector<16xf32> to vector<16x1xf32>
    %3 = tpu.iota {dimensions = array<i32: 1>} : vector<16x24xi32>
    %4 = vector.broadcast %2 : vector<16x1xf32> to vector<16x24xf32>
    %5 = arith.cmpf oeq, %0, %4 : vector<16x24xf32>
    %c24_i32 = arith.constant 24 : i32
    %6 = vector.broadcast %c24_i32 : i32 to vector<16x24xi32>
    %7 = arith.select %5, %3, %6 : vector<16x24xi1>, vector<16x24xi32>
    %cst_1 = arith.constant dense<2147483647> : vector<16xi32>
    %8 = vector.multi_reduction <minsi>, %7, %cst_1 [1] : vector<16x24xi32> to vector<16xi32>
    %9 = vector.shape_cast %8 : vector<16xi32> to vector<16x1xi32>
    %c0_2 = arith.constant 0 : index
    %c0_3 = arith.constant 0 : index
    %10 = vector.load %arg3[%c0_2, %c0_3] : memref<24x552xf32, #tpu.memory_space<vmem>>, vector<24x552xf32>
    %11 = vector.broadcast %9 : vector<16x1xi32> to vector<16x24xi32>
    %12 = arith.cmpi eq, %3, %11 : vector<16x24xi32>
    %13 = arith.extui %12 : vector<16x24xi1> to vector<16x24xi32>
    %14 = arith.sitofp %13 : vector<16x24xi32> to vector<16x24xf32>
    %cst_4 = arith.constant 2.000000e-01 : f32
    %15 = vector.broadcast %cst_4 : f32 to vector<16x1xf32>
    %16 = arith.cmpf ogt, %2, %15 : vector<16x1xf32>
    %17 = arith.extui %16 : vector<16x1xi1> to vector<16x1xi32>
    %18 = arith.sitofp %17 : vector<16x1xi32> to vector<16x1xf32>
    %cst_5 = arith.constant dense<0.000000e+00> : vector<16x552xf32>
    %19 = tpu.matmul %14, %10, %cst_5 {dimension_numbers = #tpu.dot_dimension_numbers<[1], [0], [0], [1], [0, 0, 1, 1], [], []>} : vector<16x24xf32>, vector<24x552xf32>, vector<16x552xf32> -> vector<16x552xf32>
    %c0_6 = arith.constant 0 : index
    %c0_7 = arith.constant 0 : index
    %20 = vector.load %arg4[%c0_6, %c0_7] : memref<552x256xf32, #tpu.memory_space<vmem>>, vector<552x256xf32>
    %c0_8 = arith.constant 0 : index
    %c0_9 = arith.constant 0 : index
    %21 = vector.load %arg1[%c0_8, %c0_9] : memref<16x552xf32, #tpu.memory_space<vmem>>, vector<16x552xf32>
    %22 = arith.mulf %21, %19 : vector<16x552xf32>
    %cst_10 = arith.constant dense<0.000000e+00> : vector<16x256xf32>
    %23 = tpu.matmul %22, %20, %cst_10 {dimension_numbers = #tpu.dot_dimension_numbers<[1], [0], [0], [1], [0, 0, 1, 1], [], []>} : vector<16x552xf32>, vector<552x256xf32>, vector<16x256xf32> -> vector<16x256xf32>
    %c0_11 = arith.constant 0 : index
    %c0_12 = arith.constant 0 : index
    %24 = vector.load %arg5[%c0_11, %c0_12] : memref<1x256xf32, #tpu.memory_space<vmem>>, vector<1x256xf32>
    %25 = vector.broadcast %24 : vector<1x256xf32> to vector<16x256xf32>
    %26 = arith.addf %23, %25 : vector<16x256xf32>
    %cst_13 = arith.constant 0.000000e+00 : f32
    %27 = vector.broadcast %cst_13 : f32 to vector<16x256xf32>
    %28 = arith.maximumf %26, %27 : vector<16x256xf32>
    %c0_14 = arith.constant 0 : index
    %c0_15 = arith.constant 0 : index
    %29 = vector.load %arg6[%c0_14, %c0_15] : memref<256x32xf32, #tpu.memory_space<vmem>>, vector<256x32xf32>
    %cst_16 = arith.constant dense<0.000000e+00> : vector<16x32xf32>
    %30 = tpu.matmul %28, %29, %cst_16 {dimension_numbers = #tpu.dot_dimension_numbers<[1], [0], [0], [1], [0, 0, 1, 1], [], []>} : vector<16x256xf32>, vector<256x32xf32>, vector<16x32xf32> -> vector<16x32xf32>
    %c0_17 = arith.constant 0 : index
    %c0_18 = arith.constant 0 : index
    %31 = vector.load %arg7[%c0_17, %c0_18] : memref<1x32xf32, #tpu.memory_space<vmem>>, vector<1x32xf32>
    %32 = vector.broadcast %31 : vector<1x32xf32> to vector<16x32xf32>
    %33 = arith.addf %30, %32 : vector<16x32xf32>
    %cst_19 = arith.constant 0.000000e+00 : f32
    %34 = vector.broadcast %cst_19 : f32 to vector<16x32xf32>
    %35 = arith.maximumf %33, %34 : vector<16x32xf32>
    %36 = vector.broadcast %18 : vector<16x1xf32> to vector<16x32xf32>
    %37 = arith.mulf %35, %36 : vector<16x32xf32>
    %c0_20 = arith.constant 0 : index
    %c0_21 = arith.constant 0 : index
    %38 = vector.load %arg8[%c0_20, %c0_21] : memref<16x32xf32, #tpu.memory_space<vmem>>, vector<16x32xf32>
    tpu.vector_store %arg8[%c0_20, %c0_21], %37 {strides = array<i32>} : memref<16x32xf32, #tpu.memory_space<vmem>>, vector<16x32xf32>,
    return
  }
  func.func @transform_0(%arg0: i32) -> (i32, i32) {
    %c0_i32 = arith.constant 0 : i32
    %c0_i32_0 = arith.constant 0 : i32
    return %arg0, %c0_i32 : i32, i32
  }
  func.func @transform_1(%arg0: i32) -> (i32, i32) {
    %c0_i32 = arith.constant 0 : i32
    %c0_i32_0 = arith.constant 0 : i32
    return %arg0, %c0_i32 : i32, i32
  }
  func.func @transform_2(%arg0: i32) -> (i32, i32) {
    %c0_i32 = arith.constant 0 : i32
    %c0_i32_0 = arith.constant 0 : i32
    %c0_i32_1 = arith.constant 0 : i32
    return %c0_i32, %c0_i32_0 : i32, i32
  }
  func.func @transform_3(%arg0: i32) -> (i32, i32) {
    %c0_i32 = arith.constant 0 : i32
    %c0_i32_0 = arith.constant 0 : i32
    %c0_i32_1 = arith.constant 0 : i32
    return %c0_i32, %c0_i32_0 : i32, i32
  }
  func.func @transform_4(%arg0: i32) -> (i32, i32) {
    %c0_i32 = arith.constant 0 : i32
    %c0_i32_0 = arith.constant 0 : i32
    %c0_i32_1 = arith.constant 0 : i32
    return %c0_i32, %c0_i32_0 : i32, i32
  }
  func.func @transform_5(%arg0: i32) -> (i32, i32) {
    %c0_i32 = arith.constant 0 : i32
    %c0_i32_0 = arith.constant 0 : i32
    %c0_i32_1 = arith.constant 0 : i32
    return %c0_i32, %c0_i32_0 : i32, i32
  }
  func.func @transform_6(%arg0: i32) -> (i32, i32) {
    %c0_i32 = arith.constant 0 : i32
    %c0_i32_0 = arith.constant 0 : i32
    %c0_i32_1 = arith.constant 0 : i32
    return %c0_i32, %c0_i32_0 : i32, i32
  }
  func.func @transform_7(%arg0: i32) -> (i32, i32) {
    %c0_i32 = arith.constant 0 : i32
    %c0_i32_0 = arith.constant 0 : i32
    return %arg0, %c0_i32 : i32, i32
  }
}

</mosaic_0001>

<llo_original>
// kernel: tpu_custom_call.1
$region0: #{tpu_custom_call.1}
  #allocation0 [shape = 'u32[]', space=smem, size = 0x4, offset = 0x4, fixed_abs, tag = 'smem constant byte address 0x4 - core index']
  #allocation1 [shape = 'u32[72,128]{1,0:T(1,128)}', space=vmem, size = 0x9000, scoped, tag = 'internal scratch']
  %s0 = inlined_call_operand.vmem [shape: f32[16,552], index: 0, kind: input, shape index: {}]
  %s1 = inlined_call_operand.vmem [shape: f32[16,24], index: 1, kind: input, shape index: {}]
  %s2 = inlined_call_operand.vmem [shape: f32[24,552], index: 2, kind: input, shape index: {}]
  %s3 = inlined_call_operand.hbm [shape: f32[552,256], index: 3, kind: input, shape index: {}]
  %s4 = inlined_call_operand.vmem [shape: f32[1,256], index: 4, kind: input, shape index: {}]
  %s5 = inlined_call_operand.vmem [shape: f32[256,32], index: 5, kind: input, shape index: {}]
  %s6 = inlined_call_operand.vmem [shape: f32[1,32], index: 6, kind: input, shape index: {}]
  %s7 = inlined_call_operand.hbm [shape: f32[16,32], index: 7, kind: output, shape index: {}]
  %s8 = sld [smem:[#allocation0]]
  $region42: #{tpu_custom_call.1} parent=0
    _
  %s10 = ssub.s32 1, %s8
  %s11 = scalar_select 0, %s10, %s8
  $region1: #{tpu_custom_call.1} parent=0
    #allocation2 [shape = 'u8[565248]{0}', space=vmem, size = 0x8a000, scoped, tag = 'input window, operand 3, single buffered']
    #allocation3 [shape = 's32[1]{0}', space=sflag, size = 0x4, scoped, tag = 'scoped memory for tpu_custom_call.1']
    #allocation4 [shape = 's32[1]{0}', space=sflag, size = 0x4, scoped, tag = 'scoped memory for tpu_custom_call.1']
    #allocation5 [shape = 'u8[8192]{0}', space=vmem, size = 0x2000, scoped, tag = 'output window, operand 0, single buffered']
    %12 = vsyncpa [#allocation3], 0
    %13 = vsyncpa [#allocation4], 0
    // Predicated region
    $region2: #{tpu_custom_call.1} parent=1 // pred_check
      _
    $region3: #{tpu_custom_call.1} parent=1 // pred_check_branch
      %15 = sbr.rel (0) target = $region5
    $region4: #{tpu_custom_call.1} parent=1 // pred_region
      _
    $region5: #{tpu_custom_call.1} parent=1 // pred_fallthru
      _
    // Predicated region
    $region6: #{tpu_custom_call.1} parent=1 // pred_check
      _
    $region7: #{tpu_custom_call.1} parent=1 // pred_check_branch
      %17 = sbr.rel (0) target = $region9
    $region8: #{tpu_custom_call.1} parent=1 // pred_region
      _
    $region9: #{tpu_custom_call.1} parent=1 // pred_fallthru
      _
    // Predicated region
    $region10: #{tpu_custom_call.1} parent=1 // pred_check
      _
    $region11: #{tpu_custom_call.1} parent=1 // pred_check_branch
      %19 = sbr.rel (0) target = $region13
    $region12: #{tpu_custom_call.1} parent=1 // pred_region
      _
    $region13: #{tpu_custom_call.1} parent=1 // pred_fallthru
      _
    // Predicated region
    $region14: #{tpu_custom_call.1} parent=1 // pred_check
      _
    $region15: #{tpu_custom_call.1} parent=1 // pred_check_branch
      %21 = sbr.rel (0) target = $region17
    $region16: #{tpu_custom_call.1} parent=1 // pred_region
      %23 = vsyncadd [#allocation3], 0
      %s24 = sshll.u32 %s3, 4
      %s25 = int_to_ptr.hbm [resolvable:$true] %s24
      %s26 = sshll.u32 [#allocation2], 4
      %s27 = int_to_ptr.vmem [resolvable:$true] %s26
      %32 = dma.hbm_to_vmem [thread:$0]  %s25, 17664, %s27, [#allocation3], 256, 256, 16
    $region17: #{tpu_custom_call.1} parent=1 // pred_fallthru
      _
    // Predicated region
    $region18: #{tpu_custom_call.1} parent=1 // pred_check
      _
    $region19: #{tpu_custom_call.1} parent=1 // pred_check_branch
      %34 = sbr.rel (0) target = $region21
    $region20: #{tpu_custom_call.1} parent=1 // pred_region
      _
    $region21: #{tpu_custom_call.1} parent=1 // pred_fallthru
      _
    // Predicated region
    $region22: #{tpu_custom_call.1} parent=1 // pred_check
      _
    $region23: #{tpu_custom_call.1} parent=1 // pred_check_branch
      %36 = sbr.rel (0) target = $region25
    $region24: #{tpu_custom_call.1} parent=1 // pred_region
      _
    $region25: #{tpu_custom_call.1} parent=1 // pred_fallthru
      _
    // Predicated region
    $region26: #{tpu_custom_call.1} parent=1 // pred_check
      _
    $region27: #{tpu_custom_call.1} parent=1 // pred_check_branch
      %38 = sbr.rel (0) target = $region29
    $region28: #{tpu_custom_call.1} parent=1 // pred_region
      _
    $region29: #{tpu_custom_call.1} parent=1 // pred_fallthru
      _
    // Predicated region
    $region30: #{tpu_custom_call.1} parent=1 // pred_check
      _
    $region31: #{tpu_custom_call.1} parent=1 // pred_check_branch
      %40 = sbr.rel (0) target = $region33
    $region32: #{tpu_custom_call.1} parent=1 // pred_region
      %42 = dma.done [#allocation3], 17664
    $region33: #{tpu_custom_call.1} parent=1 // pred_fallthru
      _
    %v43 = vld [vmem:[%s1] sm:$0xff]
    %v44 = vld [vmem:[%s1 + $0x8] sm:$0xff]
    %vm45 = vcmask 195584
    %v46 = vsel %vm45, %v43, -inf
    %47 = vmax.xlane.f32.xlu0 %v46
    %v48 = vpop.xlane.xlu0 %47
    %v49 = vsel %vm45, %v44, -inf
    %50 = vmax.xlane.f32.xlu0 %v49
    %v51 = vpop.xlane.xlu0 %50
    %v52 = vlaneseq
    %v53 = vand.u32 %v52, 127
    %vm54 = vcmp.eq.f32.partialorder %v43, %v48
    %vm55 = vcmp.eq.f32.partialorder %v44, %v51
    %v56 = vsel %vm54, %v53, 24
    %v57 = vsel %vm55, %v53, 24
    %v58 = vsel %vm45, %v56, 2147483647
    %v59 = vand.u32 %v58, 65535
    %v60 = vshra.s32 %v58, 16
    %v61 = vcvt.s32.f32 %v59
    %v62 = vcvt.s32.f32 %v60
    %63 = vmin.xlane.f32.xlu0 %v62
    %v64 = vpop.xlane.xlu0 %63
    %vm65 = vcmp.eq.f32.partialorder %v62, %v64
    %v66 = vsel %vm65, %v61, inf
    %67 = vmin.xlane.f32.xlu0 %v66
    %v68 = vpop.xlane.xlu0 %67
    %v69 = vcvt.f32.s32 %v68
    %v70 = vcvt.f32.s32 %v64
    %v71 = vshll.u32 %v70, 16
    %v72 = vadd.s32 %v71, %v69
    %v73 = vsel %vm45, %v57, 2147483647
    %v74 = vand.u32 %v73, 65535
    %v75 = vshra.s32 %v73, 16
    %v76 = vcvt.s32.f32 %v74
    %v77 = vcvt.s32.f32 %v75
    %78 = vmin.xlane.f32.xlu0 %v77
    %v79 = vpop.xlane.xlu0 %78
    %vm80 = vcmp.eq.f32.partialorder %v77, %v79
    %v81 = vsel %vm80, %v76, inf
    %82 = vmin.xlane.f32.xlu0 %v81
    %v83 = vpop.xlane.xlu0 %82
    %v84 = vcvt.f32.s32 %v83
    %v85 = vcvt.f32.s32 %v79
    %v86 = vshll.u32 %v85, 16
    %v87 = vadd.s32 %v86, %v84
    %v88 = vld [vmem:[%s2] sm:$0xff]
    %v89 = vld [vmem:[%s2 + $0x8] sm:$0xff]
    %v90 = vld [vmem:[%s2 + $0x10] sm:$0xff]
    %v91 = vld [vmem:[%s2 + $0x18] sm:$0xff]
    %v92 = vld [vmem:[%s2 + $0x20] sm:$0xff]
    %v93 = vld [vmem:[%s2 + $0x28] sm:$0xff]
    %v94 = vld [vmem:[%s2 + $0x30] sm:$0xff]
    %v95 = vld [vmem:[%s2 + $0x38] sm:$0xff]
    %v96 = vld [vmem:[%s2 + $0x40] sm:$0xff]
    %v97 = vld [vmem:[%s2 + $0x48] sm:$0xff]
    %v98 = vld [vmem:[%s2 + $0x50] sm:$0xff]
    %v99 = vld [vmem:[%s2 + $0x58] sm:$0xff]
    %v100 = vld [vmem:[%s2 + $0x60] sm:$0xff]
    %v101 = vld [vmem:[%s2 + $0x68] sm:$0xff]
    %v102 = vld [vmem:[%s2 + $0x70] sm:$0xff]
    %vm103 = vcmp.eq.s32.totalorder %v53, %v72
    %vm104 = vcmp.eq.s32.totalorder %v53, %v87
    %v105 = vsel %vm103, 1, 0
    %v106 = vsel %vm104, 1, 0
    %v107 = vcvt.s32.f32 %v105
    %v108 = vcvt.s32.f32 %v106
    %vm109 = vcmp.gt.f32.partialorder %v48, 0.2
    %vm110 = vcmp.gt.f32.partialorder %v51, 0.2
    %v111 = vsel %vm109, 1, 0
    %v112 = vsel %vm110, 1, 0
    %v113 = vcvt.s32.f32 %v111
    %v114 = vcvt.s32.f32 %v112
    %v116 = vsel %vm45, %v107, 0
    %v119 = vsel %vm45, %v108, 0
    %121 = vmatpush.msra.mxu0 0.0
    %122 = vmatpush.msra.mxu0 0.0
    %123 = vmatpush.msra.mxu0 0.0
    %124 = vmatpush.msra.mxu0 0.0
    %125 = vmatpush.msra.mxu0 0.0
    %126 = vmatpush.msra.mxu0 0.0
    %127 = vmatpush.msra.mxu0 0.0
    %128 = vmatpush.msra.mxu0 0.0
    %129 = vmatpush.msra.mxu0 0.0
    %130 = vmatpush.msra.mxu0 0.0
    %131 = vmatpush.msra.mxu0 0.0
    %132 = vmatpush.msra.mxu0 0.0
    %133 = vmatpush.msra.mxu0 0.0
    %134 = vmatpush.msra.mxu0 %v98
    %135 = vmatpush.msra.mxu0 %v93
    %136 = vmatpush.msra.mxu0 %v88
    %137 = vmatmul.f32.gmra.mxu0 %v116
    %v138 = vpop.f32.mrf.mxu0
    %v139 = vadd.f32 0.0, %v138
    %140 = vmatmul.f32.gmra.mxu0 %v119
    %v141 = vpop.f32.mrf.mxu0
    %v142 = vadd.f32 0.0, %v141
    %143 = vdwg.mxu0
    %144 = vmatpush.msra.mxu0 0.0
    %145 = vmatpush.msra.mxu0 0.0
    %146 = vmatpush.msra.mxu0 0.0
    %147 = vmatpush.msra.mxu0 0.0
    %148 = vmatpush.msra.mxu0 0.0
    %149 = vmatpush.msra.mxu0 0.0
    %150 = vmatpush.msra.mxu0 0.0
    %151 = vmatpush.msra.mxu0 0.0
    %152 = vmatpush.msra.mxu0 0.0
    %153 = vmatpush.msra.mxu0 0.0
    %154 = vmatpush.msra.mxu0 0.0
    %155 = vmatpush.msra.mxu0 0.0
    %156 = vmatpush.msra.mxu0 0.0
    %157 = vmatpush.msra.mxu0 %v99
    %158 = vmatpush.msra.mxu0 %v94
    %159 = vmatpush.msra.mxu0 %v89
    %160 = vmatmul.f32.gmra.mxu0 %v116
    %v161 = vpop.f32.mrf.mxu0
    %v162 = vadd.f32 0.0, %v161
    %163 = vmatmul.f32.gmra.mxu0 %v119
    %v164 = vpop.f32.mrf.mxu0
    %v165 = vadd.f32 0.0, %v164
    %166 = vdwg.mxu0
    %167 = vmatpush.msra.mxu0 0.0
    %168 = vmatpush.msra.mxu0 0.0
    %169 = vmatpush.msra.mxu0 0.0
    %170 = vmatpush.msra.mxu0 0.0
    %171 = vmatpush.msra.mxu0 0.0
    %172 = vmatpush.msra.mxu0 0.0
    %173 = vmatpush.msra.mxu0 0.0
    %174 = vmatpush.msra.mxu0 0.0
    %175 = vmatpush.msra.mxu0 0.0
    %176 = vmatpush.msra.mxu0 0.0
    %177 = vmatpush.msra.mxu0 0.0
    %178 = vmatpush.msra.mxu0 0.0
    %179 = vmatpush.msra.mxu0 0.0
    %180 = vmatpush.msra.mxu0 %v100
    %181 = vmatpush.msra.mxu0 %v95
    %182 = vmatpush.msra.mxu0 %v90
    %183 = vmatmul.f32.gmra.mxu0 %v116
    %v184 = vpop.f32.mrf.mxu0
    %v185 = vadd.f32 0.0, %v184
    %186 = vmatmul.f32.gmra.mxu0 %v119
    %v187 = vpop.f32.mrf.mxu0
    %v188 = vadd.f32 0.0, %v187
    %189 = vdwg.mxu0
    %190 = vmatpush.msra.mxu0 0.0
    %191 = vmatpush.msra.mxu0 0.0
    %192 = vmatpush.msra.mxu0 0.0
    %193 = vmatpush.msra.mxu0 0.0
    %194 = vmatpush.msra.mxu0 0.0
    %195 = vmatpush.msra.mxu0 0.0
    %196 = vmatpush.msra.mxu0 0.0
    %197 = vmatpush.msra.mxu0 0.0
    %198 = vmatpush.msra.mxu0 0.0
    %199 = vmatpush.msra.mxu0 0.0
    %200 = vmatpush.msra.mxu0 0.0
    %201 = vmatpush.msra.mxu0 0.0
    %202 = vmatpush.msra.mxu0 0.0
    %203 = vmatpush.msra.mxu0 %v101
    %204 = vmatpush.msra.mxu0 %v96
    %205 = vmatpush.msra.mxu0 %v91
    %206 = vmatmul.f32.gmra.mxu0 %v116
    %v207 = vpop.f32.mrf.mxu0
    %v208 = vadd.f32 0.0, %v207
    %209 = vmatmul.f32.gmra.mxu0 %v119
    %v210 = vpop.f32.mrf.mxu0
    %v211 = vadd.f32 0.0, %v210
    %212 = vdwg.mxu0
    %213 = vmatpush.msra.mxu0 0.0
    %214 = vmatpush.msra.mxu0 0.0
    %215 = vmatpush.msra.mxu0 0.0
    %216 = vmatpush.msra.mxu0 0.0
    %217 = vmatpush.msra.mxu0 0.0
    %218 = vmatpush.msra.mxu0 0.0
    %219 = vmatpush.msra.mxu0 0.0
    %220 = vmatpush.msra.mxu0 0.0
    %221 = vmatpush.msra.mxu0 0.0
    %222 = vmatpush.msra.mxu0 0.0
    %223 = vmatpush.msra.mxu0 0.0
    %224 = vmatpush.msra.mxu0 0.0
    %225 = vmatpush.msra.mxu0 0.0
    %226 = vmatpush.msra.mxu0 %v102
    %227 = vmatpush.msra.mxu0 %v97
    %228 = vmatpush.msra.mxu0 %v92
    %229 = vmatmul.f32.gmra.mxu0 %v116
    %v230 = vpop.f32.mrf.mxu0
    %v231 = vadd.f32 0.0, %v230
    %232 = vmatmul.f32.gmra.mxu0 %v119
    %v233 = vpop.f32.mrf.mxu0
    %v234 = vadd.f32 0.0, %v233
    %235 = vdwg.mxu0
    %v236 = vld [vmem:[#allocation2] sm:$0xff]
    %v237 = vld [vmem:[#allocation2 + $0x8] sm:$0xff]
    %v238 = vld [vmem:[#allocation2 + $0x10] sm:$0xff]
    %v239 = vld [vmem:[#allocation2 + $0x18] sm:$0xff]
    %v240 = vld [vmem:[#allocation2 + $0x20] sm:$0xff]
    %v241 = vld [vmem:[#allocation2 + $0x28] sm:$0xff]
    %v242 = vld [vmem:[#allocation2 + $0x30] sm:$0xff]
    %v243 = vld [vmem:[#allocation2 + $0x38] sm:$0xff]
    %v244 = vld [vmem:[#allocation2 + $0x40] sm:$0xff]
    %v245 = vld [vmem:[#allocation2 + $0x48] sm:$0xff]
    %v246 = vld [vmem:[#allocation2 + $0x50] sm:$0xff]
    %v247 = vld [vmem:[#allocation2 + $0x58] sm:$0xff]
    %v248 = vld [vmem:[#allocation2 + $0x60] sm:$0xff]
    %v249 = vld [vmem:[#allocation2 + $0x68] sm:$0xff]
    %v250 = vld [vmem:[#allocation2 + $0x70] sm:$0xff]
    %v251 = vld [vmem:[#allocation2 + $0x78] sm:$0xff]
    %v252 = vld [vmem:[#allocation2 + $0x80] sm:$0xff]
    %v253 = vld [vmem:[#allocation2 + $0x88] sm:$0xff]
    %v254 = vld [vmem:[#allocation2 + $0x90] sm:$0xff]
    %v255 = vld [vmem:[#allocation2 + $0x98] sm:$0xff]
    %v256 = vld [vmem:[#allocation2 + $0xa0] sm:$0xff]
    %v257 = vld [vmem:[#allocation2 + $0xa8] sm:$0xff]
    %v258 = vld [vmem:[#allocation2 + $0xb0] sm:$0xff]
    %v259 = vld [vmem:[#allocation2 + $0xb8] sm:$0xff]
    %v260 = vld [vmem:[#allocation2 + $0xc0] sm:$0xff]
    %v261 = vld [vmem:[#allocation2 + $0xc8] sm:$0xff]
    %v262 = vld [vmem:[#allocation2 + $0xd0] sm:$0xff]
    %v263 = vld [vmem:[#allocation2 + $0xd8] sm:$0xff]
    %v264 = vld [vmem:[#allocation2 + $0xe0] sm:$0xff]
    %v265 = vld [vmem:[#allocation2 + $0xe8] sm:$0xff]
    %v266 = vld [vmem:[#allocation2 + $0xf0] sm:$0xff]
    %v267 = vld [vmem:[#allocation2 + $0xf8] sm:$0xff]
    %v268 = vld [vmem:[#allocation2 + $0x100] sm:$0xff]
    %v269 = vld [vmem:[#allocation2 + $0x108] sm:$0xff]
    %v270 = vld [vmem:[#allocation2 + $0x110] sm:$0xff]
    %v271 = vld [vmem:[#allocation2 + $0x118] sm:$0xff]
    %v272 = vld [vmem:[#allocation2 + $0x120] sm:$0xff]
    %v273 = vld [vmem:[#allocation2 + $0x128] sm:$0xff]
    %v274 = vld [vmem:[#allocation2 + $0x130] sm:$0xff]
    %v275 = vld [vmem:[#allocation2 + $0x138] sm:$0xff]
    %v276 = vld [vmem:[#allocation2 + $0x140] sm:$0xff]
    %v277 = vld [vmem:[#allocation2 + $0x148] sm:$0xff]
    %v278 = vld [vmem:[#allocation2 + $0x150] sm:$0xff]
    %v279 = vld [vmem:[#allocation2 + $0x158] sm:$0xff]
    %v280 = vld [vmem:[#allocation2 + $0x160] sm:$0xff]
    %v281 = vld [vmem:[#allocation2 + $0x168] sm:$0xff]
    %v282 = vld [vmem:[#allocation2 + $0x170] sm:$0xff]
    %v283 = vld [vmem:[#allocation2 + $0x178] sm:$0xff]
    %v284 = vld [vmem:[#allocation2 + $0x180] sm:$0xff]
    %v285 = vld [vmem:[#allocation2 + $0x188] sm:$0xff]
    %v286 = vld [vmem:[#allocation2 + $0x190] sm:$0xff]
    %v287 = vld [vmem:[#allocation2 + $0x198] sm:$0xff]
    %v288 = vld [vmem:[#allocation2 + $0x1a0] sm:$0xff]
    %v289 = vld [vmem:[#allocation2 + $0x1a8] sm:$0xff]
    %v290 = vld [vmem:[#allocation2 + $0x1b0] sm:$0xff]
    %v291 = vld [vmem:[#allocation2 + $0x1b8] sm:$0xff]
    %v292 = vld [vmem:[#allocation2 + $0x1c0] sm:$0xff]
    %v293 = vld [vmem:[#allocation2 + $0x1c8] sm:$0xff]
    %v294 = vld [vmem:[#allocation2 + $0x1d0] sm:$0xff]
    %v295 = vld [vmem:[#allocation2 + $0x1d8] sm:$0xff]
    %v296 = vld [vmem:[#allocation2 + $0x1e0] sm:$0xff]
    %v297 = vld [vmem:[#allocation2 + $0x1e8] sm:$0xff]
    %v298 = vld [vmem:[#allocation2 + $0x1f0] sm:$0xff]
    %v299 = vld [vmem:[#allocation2 + $0x1f8] sm:$0xff]
    %v300 = vld [vmem:[#allocation2 + $0x200] sm:$0xff]
    %v301 = vld [vmem:[#allocation2 + $0x208] sm:$0xff]
    %v302 = vld [vmem:[#allocation2 + $0x210] sm:$0xff]
    %v303 = vld [vmem:[#allocation2 + $0x218] sm:$0xff]
    %v304 = vld [vmem:[#allocation2 + $0x220] sm:$0xff]
    %v305 = vld [vmem:[#allocation2 + $0x228] sm:$0xff]
    %v306 = vld [vmem:[#allocation2 + $0x230] sm:$0xff]
    %v307 = vld [vmem:[#allocation2 + $0x238] sm:$0xff]
    %v308 = vld [vmem:[#allocation2 + $0x240] sm:$0xff]
    %v309 = vld [vmem:[#allocation2 + $0x248] sm:$0xff]
    %v310 = vld [vmem:[#allocation2 + $0x250] sm:$0xff]
    %v311 = vld [vmem:[#allocation2 + $0x258] sm:$0xff]
    %v312 = vld [vmem:[#allocation2 + $0x260] sm:$0xff]
    %v313 = vld [vmem:[#allocation2 + $0x268] sm:$0xff]
    %v314 = vld [vmem:[#allocation2 + $0x270] sm:$0xff]
    %v315 = vld [vmem:[#allocation2 + $0x278] sm:$0xff]
    %v316 = vld [vmem:[#allocation2 + $0x280] sm:$0xff]
    %v317 = vld [vmem:[#allocation2 + $0x288] sm:$0xff]
    %v318 = vld [vmem:[#allocation2 + $0x290] sm:$0xff]
    %v319 = vld [vmem:[#allocation2 + $0x298] sm:$0xff]
    %v320 = vld [vmem:[#allocation2 + $0x2a0] sm:$0xff]
    %v321 = vld [vmem:[#allocation2 + $0x2a8] sm:$0xff]
    %v322 = vld [vmem:[#allocation2 + $0x2b0] sm:$0xff]
    %v323 = vld [vmem:[#allocation2 + $0x2b8] sm:$0xff]
    %v324 = vld [vmem:[#allocation2 + $0x2c0] sm:$0xff]
    %v325 = vld [vmem:[#allocation2 + $0x2c8] sm:$0xff]
    %v326 = vld [vmem:[#allocation2 + $0x2d0] sm:$0xff]
    %v327 = vld [vmem:[#allocation2 + $0x2d8] sm:$0xff]
    %v328 = vld [vmem:[#allocation2 + $0x2e0] sm:$0xff]
    %v329 = vld [vmem:[#allocation2 + $0x2e8] sm:$0xff]
    %v330 = vld [vmem:[#allocation2 + $0x2f0] sm:$0xff]
    %v331 = vld [vmem:[#allocation2 + $0x2f8] sm:$0xff]
    %v332 = vld [vmem:[#allocation2 + $0x300] sm:$0xff]
    %v333 = vld [vmem:[#allocation2 + $0x308] sm:$0xff]
    %v334 = vld [vmem:[#allocation2 + $0x310] sm:$0xff]
    %v335 = vld [vmem:[#allocation2 + $0x318] sm:$0xff]
    %v336 = vld [vmem:[#allocation2 + $0x320] sm:$0xff]
    %v337 = vld [vmem:[#allocation2 + $0x328] sm:$0xff]
    %v338 = vld [vmem:[#allocation2 + $0x330] sm:$0xff]
    %v339 = vld [vmem:[#allocation2 + $0x338] sm:$0xff]
    %v340 = vld [vmem:[#allocation2 + $0x340] sm:$0xff]
    %v341 = vld [vmem:[#allocation2 + $0x348] sm:$0xff]
    %v342 = vld [vmem:[#allocation2 + $0x350] sm:$0xff]
    %v343 = vld [vmem:[#allocation2 + $0x358] sm:$0xff]
    %v344 = vld [vmem:[#allocation2 + $0x360] sm:$0xff]
    %v345 = vld [vmem:[#allocation2 + $0x368] sm:$0xff]
    %v346 = vld [vmem:[#allocation2 + $0x370] sm:$0xff]
    %v347 = vld [vmem:[#allocation2 + $0x378] sm:$0xff]
    %v348 = vld [vmem:[#allocation2 + $0x380] sm:$0xff]
    %v349 = vld [vmem:[#allocation2 + $0x388] sm:$0xff]
    %v350 = vld [vmem:[#allocation2 + $0x390] sm:$0xff]
    %v351 = vld [vmem:[#allocation2 + $0x398] sm:$0xff]
    %v352 = vld [vmem:[#allocation2 + $0x3a0] sm:$0xff]
    %v353 = vld [vmem:[#allocation2 + $0x3a8] sm:$0xff]
    %v354 = vld [vmem:[#allocation2 + $0x3b0] sm:$0xff]
    %v355 = vld [vmem:[#allocation2 + $0x3b8] sm:$0xff]
    %v356 = vld [vmem:[#allocation2 + $0x3c0] sm:$0xff]
    %v357 = vld [vmem:[#allocation2 + $0x3c8] sm:$0xff]
    %v358 = vld [vmem:[#allocation2 + $0x3d0] sm:$0xff]
    %v359 = vld [vmem:[#allocation2 + $0x3d8] sm:$0xff]
    %v360 = vld [vmem:[#allocation2 + $0x3e0] sm:$0xff]
    %v361 = vld [vmem:[#allocation2 + $0x3e8] sm:$0xff]
    %v362 = vld [vmem:[#allocation2 + $0x3f0] sm:$0xff]
    %v363 = vld [vmem:[#allocation2 + $0x3f8] sm:$0xff]
    %v364 = vld [vmem:[#allocation2 + $0x400] sm:$0xff]
    %v365 = vld [vmem:[#allocation2 + $0x408] sm:$0xff]
    %v366 = vld [vmem:[#allocation2 + $0x410] sm:$0xff]
    %v367 = vld [vmem:[#allocation2 + $0x418] sm:$0xff]
    %v368 = vld [vmem:[#allocation2 + $0x420] sm:$0xff]
    %v369 = vld [vmem:[#allocation2 + $0x428] sm:$0xff]
    %v370 = vld [vmem:[#allocation2 + $0x430] sm:$0xff]
    %v371 = vld [vmem:[#allocation2 + $0x438] sm:$0xff]
    %v372 = vld [vmem:[#allocation2 + $0x440] sm:$0xff]
    %v373 = vld [vmem:[#allocation2 + $0x448] sm:$0xff]
    %v374 = vld [vmem:[%s0] sm:$0xff]
    %v375 = vld [vmem:[%s0 + $0x8] sm:$0xff]
    %v376 = vld [vmem:[%s0 + $0x10] sm:$0xff]
    %v377 = vld [vmem:[%s0 + $0x18] sm:$0xff]
    %v378 = vld [vmem:[%s0 + $0x20] sm:$0xff]
    %v379 = vld [vmem:[%s0 + $0x28] sm:$0xff]
    %v380 = vld [vmem:[%s0 + $0x30] sm:$0xff]
    %v381 = vld [vmem:[%s0 + $0x38] sm:$0xff]
    %v382 = vld [vmem:[%s0 + $0x40] sm:$0xff]
    %v383 = vld [vmem:[%s0 + $0x48] sm:$0xff]
    %v384 = vmul.f32 %v374, %v139
    %v385 = vmul.f32 %v375, %v162
    %v386 = vmul.f32 %v376, %v185
    %v387 = vmul.f32 %v377, %v208
    %v388 = vmul.f32 %v378, %v231
    %v389 = vmul.f32 %v379, %v142
    %v390 = vmul.f32 %v380, %v165
    %v391 = vmul.f32 %v381, %v188
    %v392 = vmul.f32 %v382, %v211
    %v393 = vmul.f32 %v383, %v234
    %v394 = vld [vmem:[%s4] sm:$0x3]
    %v396 = vperm.slane %v394, 0
    %v397 = vperm.slane %v394, 1
    %vm400 = vcmask 326656
    %v402 = vsel %vm400, %v388, 0
    %v405 = vsel %vm400, %v393, 0
    %407 = vmatpush.msra.mxu0 %v266
    %408 = vmatpush.msra.mxu0 %v264
    %409 = vmatpush.msra.mxu0 %v262
    %410 = vmatpush.msra.mxu0 %v260
    %411 = vmatpush.msra.mxu0 %v258
    %412 = vmatpush.msra.mxu0 %v256
    %413 = vmatpush.msra.mxu0 %v254
    %414 = vmatpush.msra.mxu0 %v252
    %415 = vmatpush.msra.mxu0 %v250
    %416 = vmatpush.msra.mxu0 %v248
    %417 = vmatpush.msra.mxu0 %v246
    %418 = vmatpush.msra.mxu0 %v244
    %419 = vmatpush.msra.mxu0 %v242
    %420 = vmatpush.msra.mxu0 %v240
    %421 = vmatpush.msra.mxu0 %v238
    %422 = vmatpush.msra.mxu0 %v236
    %423 = vmatmul.f32.gmra.mxu0 %v384
    %v424 = vpop.f32.mrf.mxu0
    %v425 = vadd.f32 %v396, %v424
    %426 = vmatmul.f32.gmra.mxu0 %v389
    %v427 = vpop.f32.mrf.mxu0
    %v428 = vadd.f32 %v396, %v427
    %429 = vdwg.mxu0
    %430 = vmatpush.msra.mxu0 %v298
    %431 = vmatpush.msra.mxu0 %v296
    %432 = vmatpush.msra.mxu0 %v294
    %433 = vmatpush.msra.mxu0 %v292
    %434 = vmatpush.msra.mxu0 %v290
    %435 = vmatpush.msra.mxu0 %v288
    %436 = vmatpush.msra.mxu0 %v286
    %437 = vmatpush.msra.mxu0 %v284
    %438 = vmatpush.msra.mxu0 %v282
    %439 = vmatpush.msra.mxu0 %v280
    %440 = vmatpush.msra.mxu0 %v278
    %441 = vmatpush.msra.mxu0 %v276
    %442 = vmatpush.msra.mxu0 %v274
    %443 = vmatpush.msra.mxu0 %v272
    %444 = vmatpush.msra.mxu0 %v270
    %445 = vmatpush.msra.mxu0 %v268
    %446 = vmatmul.f32.gmra.mxu0 %v385
    %v447 = vpop.f32.mrf.mxu0
    %v448 = vadd.f32 %v425, %v447
    %449 = vmatmul.f32.gmra.mxu0 %v390
    %v450 = vpop.f32.mrf.mxu0
    %v451 = vadd.f32 %v428, %v450
    %452 = vdwg.mxu0
    %453 = vmatpush.msra.mxu0 %v330
    %454 = vmatpush.msra.mxu0 %v328
    %455 = vmatpush.msra.mxu0 %v326
    %456 = vmatpush.msra.mxu0 %v324
    %457 = vmatpush.msra.mxu0 %v322
    %458 = vmatpush.msra.mxu0 %v320
    %459 = vmatpush.msra.mxu0 %v318
    %460 = vmatpush.msra.mxu0 %v316
    %461 = vmatpush.msra.mxu0 %v314
    %462 = vmatpush.msra.mxu0 %v312
    %463 = vmatpush.msra.mxu0 %v310
    %464 = vmatpush.msra.mxu0 %v308
    %465 = vmatpush.msra.mxu0 %v306
    %466 = vmatpush.msra.mxu0 %v304
    %467 = vmatpush.msra.mxu0 %v302
    %468 = vmatpush.msra.mxu0 %v300
    %469 = vmatmul.f32.gmra.mxu0 %v386
    %v470 = vpop.f32.mrf.mxu0
    %v471 = vadd.f32 %v448, %v470
    %472 = vmatmul.f32.gmra.mxu0 %v391
    %v473 = vpop.f32.mrf.mxu0
    %v474 = vadd.f32 %v451, %v473
    %475 = vdwg.mxu0
    %476 = vmatpush.msra.mxu0 %v362
    %477 = vmatpush.msra.mxu0 %v360
    %478 = vmatpush.msra.mxu0 %v358
    %479 = vmatpush.msra.mxu0 %v356
    %480 = vmatpush.msra.mxu0 %v354
    %481 = vmatpush.msra.mxu0 %v352
    %482 = vmatpush.msra.mxu0 %v350
    %483 = vmatpush.msra.mxu0 %v348
    %484 = vmatpush.msra.mxu0 %v346
    %485 = vmatpush.msra.mxu0 %v344
    %486 = vmatpush.msra.mxu0 %v342
    %487 = vmatpush.msra.mxu0 %v340
    %488 = vmatpush.msra.mxu0 %v338
    %489 = vmatpush.msra.mxu0 %v336
    %490 = vmatpush.msra.mxu0 %v334
    %491 = vmatpush.msra.mxu0 %v332
    %492 = vmatmul.f32.gmra.mxu0 %v387
    %v493 = vpop.f32.mrf.mxu0
    %v494 = vadd.f32 %v471, %v493
    %495 = vmatmul.f32.gmra.mxu0 %v392
    %v496 = vpop.f32.mrf.mxu0
    %v497 = vadd.f32 %v474, %v496
    %498 = vdwg.mxu0
    %499 = vmatpush.msra.mxu0 0.0
    %500 = vmatpush.msra.mxu0 0.0
    %501 = vmatpush.msra.mxu0 0.0
    %502 = vmatpush.msra.mxu0 0.0
    %503 = vmatpush.msra.mxu0 0.0
    %504 = vmatpush.msra.mxu0 0.0
    %505 = vmatpush.msra.mxu0 0.0
    %506 = vmatpush.msra.mxu0 0.0
    %507 = vmatpush.msra.mxu0 0.0
    %508 = vmatpush.msra.mxu0 0.0
    %509 = vmatpush.msra.mxu0 0.0
    %510 = vmatpush.msra.mxu0 %v372
    %511 = vmatpush.msra.mxu0 %v370
    %512 = vmatpush.msra.mxu0 %v368
    %513 = vmatpush.msra.mxu0 %v366
    %514 = vmatpush.msra.mxu0 %v364
    %515 = vmatmul.f32.gmra.mxu0 %v402
    %v516 = vpop.f32.mrf.mxu0
    %v517 = vadd.f32 %v494, %v516
    %518 = vmatmul.f32.gmra.mxu0 %v405
    %v519 = vpop.f32.mrf.mxu0
    %v520 = vadd.f32 %v497, %v519
    %521 = vdwg.mxu0
    %522 = vmatpush.msra.mxu0 %v267
    %523 = vmatpush.msra.mxu0 %v265
    %524 = vmatpush.msra.mxu0 %v263
    %525 = vmatpush.msra.mxu0 %v261
    %526 = vmatpush.msra.mxu0 %v259
    %527 = vmatpush.msra.mxu0 %v257
    %528 = vmatpush.msra.mxu0 %v255
    %529 = vmatpush.msra.mxu0 %v253
    %530 = vmatpush.msra.mxu0 %v251
    %531 = vmatpush.msra.mxu0 %v249
    %532 = vmatpush.msra.mxu0 %v247
    %533 = vmatpush.msra.mxu0 %v245
    %534 = vmatpush.msra.mxu0 %v243
    %535 = vmatpush.msra.mxu0 %v241
    %536 = vmatpush.msra.mxu0 %v239
    %537 = vmatpush.msra.mxu0 %v237
    %538 = vmatmul.f32.gmra.mxu0 %v384
    %v539 = vpop.f32.mrf.mxu0
    %v540 = vadd.f32 %v397, %v539
    %541 = vmatmul.f32.gmra.mxu0 %v389
    %v542 = vpop.f32.mrf.mxu0
    %v543 = vadd.f32 %v397, %v542
    %544 = vdwg.mxu0
    %545 = vmatpush.msra.mxu0 %v299
    %546 = vmatpush.msra.mxu0 %v297
    %547 = vmatpush.msra.mxu0 %v295
    %548 = vmatpush.msra.mxu0 %v293
    %549 = vmatpush.msra.mxu0 %v291
    %550 = vmatpush.msra.mxu0 %v289
    %551 = vmatpush.msra.mxu0 %v287
    %552 = vmatpush.msra.mxu0 %v285
    %553 = vmatpush.msra.mxu0 %v283
    %554 = vmatpush.msra.mxu0 %v281
    %555 = vmatpush.msra.mxu0 %v279
    %556 = vmatpush.msra.mxu0 %v277
    %557 = vmatpush.msra.mxu0 %v275
    %558 = vmatpush.msra.mxu0 %v273
    %559 = vmatpush.msra.mxu0 %v271
    %560 = vmatpush.msra.mxu0 %v269
    %561 = vmatmul.f32.gmra.mxu0 %v385
    %v562 = vpop.f32.mrf.mxu0
    %v563 = vadd.f32 %v540, %v562
    %564 = vmatmul.f32.gmra.mxu0 %v390
    %v565 = vpop.f32.mrf.mxu0
    %v566 = vadd.f32 %v543, %v565
    %567 = vdwg.mxu0
    %568 = vmatpush.msra.mxu0 %v331
    %569 = vmatpush.msra.mxu0 %v329
    %570 = vmatpush.msra.mxu0 %v327
    %571 = vmatpush.msra.mxu0 %v325
    %572 = vmatpush.msra.mxu0 %v323
    %573 = vmatpush.msra.mxu0 %v321
    %574 = vmatpush.msra.mxu0 %v319
    %575 = vmatpush.msra.mxu0 %v317
    %576 = vmatpush.msra.mxu0 %v315
    %577 = vmatpush.msra.mxu0 %v313
    %578 = vmatpush.msra.mxu0 %v311
    %579 = vmatpush.msra.mxu0 %v309
    %580 = vmatpush.msra.mxu0 %v307
    %581 = vmatpush.msra.mxu0 %v305
    %582 = vmatpush.msra.mxu0 %v303
    %583 = vmatpush.msra.mxu0 %v301
    %584 = vmatmul.f32.gmra.mxu0 %v386
    %v585 = vpop.f32.mrf.mxu0
    %v586 = vadd.f32 %v563, %v585
    %587 = vmatmul.f32.gmra.mxu0 %v391
    %v588 = vpop.f32.mrf.mxu0
    %v589 = vadd.f32 %v566, %v588
    %590 = vdwg.mxu0
    %591 = vmatpush.msra.mxu0 %v363
    %592 = vmatpush.msra.mxu0 %v361
    %593 = vmatpush.msra.mxu0 %v359
    %594 = vmatpush.msra.mxu0 %v357
    %595 = vmatpush.msra.mxu0 %v355
    %596 = vmatpush.msra.mxu0 %v353
    %597 = vmatpush.msra.mxu0 %v351
    %598 = vmatpush.msra.mxu0 %v349
    %599 = vmatpush.msra.mxu0 %v347
    %600 = vmatpush.msra.mxu0 %v345
    %601 = vmatpush.msra.mxu0 %v343
    %602 = vmatpush.msra.mxu0 %v341
    %603 = vmatpush.msra.mxu0 %v339
    %604 = vmatpush.msra.mxu0 %v337
    %605 = vmatpush.msra.mxu0 %v335
    %606 = vmatpush.msra.mxu0 %v333
    %607 = vmatmul.f32.gmra.mxu0 %v387
    %v608 = vpop.f32.mrf.mxu0
    %v609 = vadd.f32 %v586, %v608
    %610 = vmatmul.f32.gmra.mxu0 %v392
    %v611 = vpop.f32.mrf.mxu0
    %v612 = vadd.f32 %v589, %v611
    %613 = vdwg.mxu0
    %614 = vmatpush.msra.mxu0 0.0
    %615 = vmatpush.msra.mxu0 0.0
    %616 = vmatpush.msra.mxu0 0.0
    %617 = vmatpush.msra.mxu0 0.0
    %618 = vmatpush.msra.mxu0 0.0
    %619 = vmatpush.msra.mxu0 0.0
    %620 = vmatpush.msra.mxu0 0.0
    %621 = vmatpush.msra.mxu0 0.0
    %622 = vmatpush.msra.mxu0 0.0
    %623 = vmatpush.msra.mxu0 0.0
    %624 = vmatpush.msra.mxu0 0.0
    %625 = vmatpush.msra.mxu0 %v373
    %626 = vmatpush.msra.mxu0 %v371
    %627 = vmatpush.msra.mxu0 %v369
    %628 = vmatpush.msra.mxu0 %v367
    %629 = vmatpush.msra.mxu0 %v365
    %630 = vmatmul.f32.gmra.mxu0 %v402
    %v631 = vpop.f32.mrf.mxu0
    %v632 = vadd.f32 %v609, %v631
    %633 = vmatmul.f32.gmra.mxu0 %v405
    %v634 = vpop.f32.mrf.mxu0
    %v635 = vadd.f32 %v612, %v634
    %636 = vdwg.mxu0
    %v637 = vmax.f32 %v517, 0.0
    %v638 = vmax.f32 %v632, 0.0
    %v639 = vmax.f32 %v520, 0.0
    %v640 = vmax.f32 %v635, 0.0
    %v641 = vld [vmem:[%s5] sm:$0xff]
    %v642 = vld [vmem:[%s5 + $0x8] sm:$0xff]
    %v643 = vld [vmem:[%s5 + $0x10] sm:$0xff]
    %v644 = vld [vmem:[%s5 + $0x18] sm:$0xff]
    %v645 = vld [vmem:[%s5 + $0x20] sm:$0xff]
    %v646 = vld [vmem:[%s5 + $0x28] sm:$0xff]
    %v647 = vld [vmem:[%s5 + $0x30] sm:$0xff]
    %v648 = vld [vmem:[%s5 + $0x38] sm:$0xff]
    %v649 = vld [vmem:[%s5 + $0x40] sm:$0xff]
    %v650 = vld [vmem:[%s5 + $0x48] sm:$0xff]
    %v651 = vld [vmem:[%s5 + $0x50] sm:$0xff]
    %v652 = vld [vmem:[%s5 + $0x58] sm:$0xff]
    %v653 = vld [vmem:[%s5 + $0x60] sm:$0xff]
    %v654 = vld [vmem:[%s5 + $0x68] sm:$0xff]
    %v655 = vld [vmem:[%s5 + $0x70] sm:$0xff]
    %v656 = vld [vmem:[%s5 + $0x78] sm:$0xff]
    %v657 = vld [vmem:[%s5 + $0x80] sm:$0xff]
    %v658 = vld [vmem:[%s5 + $0x88] sm:$0xff]
    %v659 = vld [vmem:[%s5 + $0x90] sm:$0xff]
    %v660 = vld [vmem:[%s5 + $0x98] sm:$0xff]
    %v661 = vld [vmem:[%s5 + $0xa0] sm:$0xff]
    %v662 = vld [vmem:[%s5 + $0xa8] sm:$0xff]
    %v663 = vld [vmem:[%s5 + $0xb0] sm:$0xff]
    %v664 = vld [vmem:[%s5 + $0xb8] sm:$0xff]
    %v665 = vld [vmem:[%s5 + $0xc0] sm:$0xff]
    %v666 = vld [vmem:[%s5 + $0xc8] sm:$0xff]
    %v667 = vld [vmem:[%s5 + $0xd0] sm:$0xff]
    %v668 = vld [vmem:[%s5 + $0xd8] sm:$0xff]
    %v669 = vld [vmem:[%s5 + $0xe0] sm:$0xff]
    %v670 = vld [vmem:[%s5 + $0xe8] sm:$0xff]
    %v671 = vld [vmem:[%s5 + $0xf0] sm:$0xff]
    %v672 = vld [vmem:[%s5 + $0xf8] sm:$0xff]
    %v673 = vld [vmem:[%s6] sm:$0x1]
    %v675 = vperm.slane %v673, 0
    %677 = vmatpush.msra.mxu0 %v656
    %678 = vmatpush.msra.mxu0 %v655
    %679 = vmatpush.msra.mxu0 %v654
    %680 = vmatpush.msra.mxu0 %v653
    %681 = vmatpush.msra.mxu0 %v652
    %682 = vmatpush.msra.mxu0 %v651
    %683 = vmatpush.msra.mxu0 %v650
    %684 = vmatpush.msra.mxu0 %v649
    %685 = vmatpush.msra.mxu0 %v648
    %686 = vmatpush.msra.mxu0 %v647
    %687 = vmatpush.msra.mxu0 %v646
    %688 = vmatpush.msra.mxu0 %v645
    %689 = vmatpush.msra.mxu0 %v644
    %690 = vmatpush.msra.mxu0 %v643
    %691 = vmatpush.msra.mxu0 %v642
    %692 = vmatpush.msra.mxu0 %v641
    %693 = vmatmul.f32.gmra.mxu0 %v637
    %v694 = vpop.f32.mrf.mxu0
    %v695 = vadd.f32 %v675, %v694
    %696 = vmatmul.f32.gmra.mxu0 %v639
    %v697 = vpop.f32.mrf.mxu0
    %v698 = vadd.f32 %v675, %v697
    %699 = vdwg.mxu0
    %700 = vmatpush.msra.mxu0 %v672
    %701 = vmatpush.msra.mxu0 %v671
    %702 = vmatpush.msra.mxu0 %v670
    %703 = vmatpush.msra.mxu0 %v669
    %704 = vmatpush.msra.mxu0 %v668
    %705 = vmatpush.msra.mxu0 %v667
    %706 = vmatpush.msra.mxu0 %v666
    %707 = vmatpush.msra.mxu0 %v665
    %708 = vmatpush.msra.mxu0 %v664
    %709 = vmatpush.msra.mxu0 %v663
    %710 = vmatpush.msra.mxu0 %v662
    %711 = vmatpush.msra.mxu0 %v661
    %712 = vmatpush.msra.mxu0 %v660
    %713 = vmatpush.msra.mxu0 %v659
    %714 = vmatpush.msra.mxu0 %v658
    %715 = vmatpush.msra.mxu0 %v657
    %716 = vmatmul.f32.gmra.mxu0 %v638
    %v717 = vpop.f32.mrf.mxu0
    %v718 = vadd.f32 %v695, %v717
    %719 = vmatmul.f32.gmra.mxu0 %v640
    %v720 = vpop.f32.mrf.mxu0
    %v721 = vadd.f32 %v698, %v720
    %722 = vdwg.mxu0
    %v723 = vmax.f32 %v718, 0.0
    %v724 = vmax.f32 %v721, 0.0
    %v725 = vmul.f32 %v723, %v113
    %v726 = vmul.f32 %v724, %v114
    %vm727 = vcmask 261120
    %728 = vst.msk [vmem:[#allocation5] sm:$0xff] %vm727, %v725
    %729 = vst.msk [vmem:[#allocation5 + $0x8] sm:$0xff] %vm727, %v726
    // Predicated region
    $region34: #{tpu_custom_call.1} parent=1 // pred_check
      _
    $region35: #{tpu_custom_call.1} parent=1 // pred_check_branch
      %731 = sbr.rel (0) target = $region37
    $region36: #{tpu_custom_call.1} parent=1 // pred_region
      %733 = vsyncadd [#allocation4], 0
      %s734 = sshll.u32 [#allocation5], 4
      %s735 = int_to_ptr.vmem [resolvable:$true] %s734
      %s736 = sshll.u32 %s7, 4
      %s737 = int_to_ptr.hbm [resolvable:$true] %s736
      %742 = dma.vmem_to_hbm [thread:$0]  %s735, 256, %s737, [#allocation4], 128, 128, 8
    $region37: #{tpu_custom_call.1} parent=1 // pred_fallthru
      _
    // Predicated region
    $region38: #{tpu_custom_call.1} parent=1 // pred_check
      _
    $region39: #{tpu_custom_call.1} parent=1 // pred_check_branch
      %744 = sbr.rel (0) target = $region41
    $region40: #{tpu_custom_call.1} parent=1 // pred_region
      %746 = dma.done [#allocation4], 256
    $region41: #{tpu_custom_call.1} parent=1 // pred_fallthru
      _
    %747 = vsyncpa [#allocation3], 1
    %748 = vsyncpa [#allocation4], 1

</llo_original>
